<compile_context>
chip_gen: v7x
topology: tpu7x:2x2x1
jax: 0.10.0
libtpu: 0.0.40
codegen_flags: <defaults>
</compile_context>

<pallas_src>
import functools

import jax
import jax.numpy as jnp
import numpy as np
from jax.experimental import pallas as pl
from jax.experimental.pallas import tpu as pltpu

LEAKY_SLOPE = 0.01  # nn.LeakyReLU default negative_slope


def _attention_kernel(x_ref, w1f_ref, b1f_ref, w2d_ref, b2d_ref, w2a_ref,
                      b2a_ref, w1g_ref, b1g_ref, w2g_ref, b2g_ref, out_ref,
                      *, b_tile, n_near, n_point, channel):
    # x_ref block: (B_tile, N, 2C) with tokens ordered (batch, near, point).
    N = n_near * n_point
    T = b_tile * N
    # Leading-dim merge only (N is sublane-aligned here) -> layout-free.
    x = x_ref[...].reshape(T, 2 * channel)

    def leaky(v):
        return jnp.where(v > 0, v, LEAKY_SLOPE * v)

    # Fused first layer of fai/psi/alpha: one (T, 2C) x (2C, 3H) MXU op.
    h = leaky(jnp.dot(x, w1f_ref[...], preferred_element_type=jnp.float32)
              + b1f_ref[...].astype(jnp.float32))                      # (T, 3H)

    # fai(x_i) - psi(x_j): subtraction folded into the fused layer-2 weights.
    gin = (jnp.dot(h, w2d_ref[...], preferred_element_type=jnp.float32)
           + b2d_ref[...].astype(jnp.float32))                         # (T, C)

    # alpha(x_j), with the C / n_near scaling pre-folded into its weights.
    alpha = (jnp.dot(h, w2a_ref[...], preferred_element_type=jnp.float32)
             + b2a_ref[...].astype(jnp.float32))                       # (T, C)

    # gamma MLP on (fai - psi).
    gh = leaky(jnp.dot(gin, w1g_ref[...], preferred_element_type=jnp.float32)
               + b1g_ref[...].astype(jnp.float32))                     # (T, H)
    g = (jnp.dot(gh, w2g_ref[...], preferred_element_type=jnp.float32)
         + b2g_ref[...].astype(jnp.float32))                           # (T, C)

    # Softmax over the channel dim (last dim here == dim=1 in NCHW).
    g = g - jnp.max(g, axis=-1, keepdims=True)
    e = jnp.exp(g)
    p = e / jnp.sum(e, axis=-1, keepdims=True)

    y = p * alpha                                                      # (T, C)

    # Sum over n_near: split leading dims (layout-free) and reduce.
    acc = y.reshape(b_tile, n_near, n_point, channel).sum(axis=1)
    out_ref[...] = acc.astype(out_ref.dtype)


def _choose_b_tile(bs, N, target_tokens=1024):
    """Largest divisor of bs with B_tile*N <= target, keeping >=2 grid steps."""
    best = 1
    for d in range(1, bs + 1):
        if bs % d != 0:
            continue
        if d * N > target_tokens:
            continue
        if bs >= 2 and (bs // d) < 2:   # keep both v7x TensorCores busy
            continue
        best = d
    return best


def _fuse_params(params, C, H, n_near):
    """Pre-fuse the four tiny MLPs into block-diagonal weights (wrapper-side)."""
    w1, b1, w2, b2 = params        # stacked [fai, psi, alpha, gamma]
    scale = jnp.asarray(C / n_near, w2.dtype)
    w2a_s = w2[2] * scale          # fold `channel *` and `/ n_near` into alpha
    b2a_s = b2[2] * scale

    zCH = jnp.zeros((C, H), w1.dtype)
    zHC = jnp.zeros((H, C), w2.dtype)

    # Layer 1 of fai/psi/alpha as one block matrix acting on [x_i | x_j].
    w1f = jnp.concatenate([
        jnp.concatenate([w1[0], zCH, zCH], axis=1),    # x_i rows -> fai hidden
        jnp.concatenate([zCH, w1[1], w1[2]], axis=1),  # x_j rows -> psi/alpha
    ], axis=0)                                         # (2C, 3H)
    b1f = jnp.concatenate([b1[0], b1[1], b1[2]], axis=1)  # (1, 3H)

    # Layer 2 producing (fai - psi) directly, and scaled alpha.
    w2d = jnp.concatenate([w2[0], -w2[1], zHC], axis=0)   # (3H, C)
    b2d = b2[0] - b2[1]                                    # (1, C)
    w2a = jnp.concatenate([zHC, zHC, w2a_s], axis=0)       # (3H, C)
    b2a = b2a_s                                            # (1, C)

    # gamma MLP stays standalone (depends on fai - psi).
    return w1f, b1f, w2d, b2d, w2a, b2a, w1[3], b1[3], w2[3], b2[3]


@jax.jit
def attention_in_pnts(x_i, x_j, params):
    """x_i, x_j: NCHW (bs, C, n_near, n_point). Returns (bs, n_point, C)."""
    bs, C, n_near, n_point = x_j.shape
    N = n_near * n_point
    w1 = params[0]
    H = w1.shape[-1]

    # NCHW -> (bs, n_near, n_point, C) -> (bs, N, C); concat channels of x_i|x_j
    # so the kernel has a single input stream (one DMA per tile).
    xi = jnp.transpose(x_i, (0, 2, 3, 1)).reshape(bs, N, C)
    xj = jnp.transpose(x_j, (0, 2, 3, 1)).reshape(bs, N, C)
    xcat = jnp.concatenate([xi, xj], axis=-1)               # (bs, N, 2C)

    fused = _fuse_params(params, C, H, n_near)

    b_tile = _choose_b_tile(bs, N)
    grid = (bs // b_tile,)

    kernel = functools.partial(_attention_kernel, b_tile=b_tile,
                               n_near=n_near, n_point=n_point, channel=C)

    const = lambda b: (0, 0)   # weights: constant index map, stay VMEM-resident
    return pl.pallas_call(
        kernel,
        out_shape=jax.ShapeDtypeStruct((bs, n_point, C), xcat.dtype),
        grid=grid,
        in_specs=[
            pl.BlockSpec((b_tile, N, 2 * C), lambda b: (b, 0, 0)),
            pl.BlockSpec((2 * C, 3 * H), const),   # w1 fused  (fai|psi|alpha)
            pl.BlockSpec((1, 3 * H), const),       # b1 fused
            pl.BlockSpec((3 * H, C), const),       # w2 (fai - psi)
            pl.BlockSpec((1, C), const),           # b2 (fai - psi)
            pl.BlockSpec((3 * H, C), const),       # w2 alpha * C/n_near
            pl.BlockSpec((1, C), const),           # b2 alpha * C/n_near
            pl.BlockSpec((C, H), const),           # gamma layer 1
            pl.BlockSpec((1, H), const),
            pl.BlockSpec((H, C), const),           # gamma layer 2
            pl.BlockSpec((1, C), const),
        ],
        out_specs=pl.BlockSpec((b_tile, n_point, C), lambda b: (b, 0, 0)),
        compiler_params=pltpu.CompilerParams(dimension_semantics=("parallel",)),
    )(xcat, *fused)


def reference(x_i, x_j, params):
    """Pure-JAX reference mirroring the PyTorch forward (NCHW)."""
    bs, C, n_near, n_point = x_j.shape
    w1, b1, w2, b2 = params

    def mlp(x, k):
        xcl = jnp.transpose(x, (0, 2, 3, 1))               # (bs, n_near, n_point, C)
        h = xcl @ w1[k] + b1[k]
        h = jnp.where(h > 0, h, LEAKY_SLOPE * h)
        o = h @ w2[k] + b2[k]
        return jnp.transpose(o, (0, 3, 1, 2))               # back to NCHW

    fai = mlp(x_i, 0)
    psi = mlp(x_j, 1)
    alpha = mlp(x_j, 2)
    g = mlp(fai - psi, 3)
    p = jax.nn.softmax(g, axis=1)                           # softmax over channels
    y = C * p * alpha
    y = jnp.sum(y, axis=2) / n_near                         # (bs, C, n_point)
    return jnp.transpose(y, (0, 2, 1))                      # (bs, n_point, C)


if __name__ == "__main__":
    key = jax.random.PRNGKey(0)
    bs, C, n_near, n_point = 2, 8, 4, 16
    H = C + 8
    ks = jax.random.split(key, 6)

    # x_i: the center point repeated along the neighbor axis (typical usage);
    # x_j: the n_near neighbor features.  The kernel keeps the general path.
    x_center = jax.random.normal(ks[0], (bs, C, 1, n_point), jnp.float32)
    x_i = jnp.broadcast_to(x_center, (bs, C, n_near, n_point))
    x_j = jax.random.normal(ks[1], (bs, C, n_near, n_point), jnp.float32)

    # Deterministic parameters for the 4 MLPs, stacked as [fai, psi, alpha, gamma].
    w1 = 0.2 * jax.random.normal(ks[2], (4, C, H), jnp.float32)
    b1 = 0.1 * jax.random.normal(ks[3], (4, 1, H), jnp.float32)
    w2 = 0.2 * jax.random.normal(ks[4], (4, H, C), jnp.float32)
    b2 = 0.1 * jax.random.normal(ks[5], (4, 1, C), jnp.float32)
    params = (w1, b1, w2, b2)

    out = attention_in_pnts(x_i, x_j, params)
    out = jax.block_until_ready(out)

    ref = reference(x_i, x_j, params)
    np.testing.assert_allclose(np.asarray(out), np.asarray(ref), rtol=1e-4, atol=1e-4)
    print("KERNEL_OK")
</pallas_src>

<mosaic_0001>
module attributes {stable_mosaic.version = 11 : i64} {
  func.func @_attention_kernel(%arg0: i32, %arg1: memref<1x64x16xf32, #tpu.memory_space<vmem>>, %arg2: memref<16x48xf32, #tpu.memory_space<vmem>>, %arg3: memref<1x48xf32, #tpu.memory_space<vmem>>, %arg4: memref<48x8xf32, #tpu.memory_space<vmem>>, %arg5: memref<1x8xf32, #tpu.memory_space<vmem>>, %arg6: memref<48x8xf32, #tpu.memory_space<vmem>>, %arg7: memref<1x8xf32, #tpu.memory_space<vmem>>, %arg8: memref<8x16xf32, #tpu.memory_space<vmem>>, %arg9: memref<1x16xf32, #tpu.memory_space<vmem>>, %arg10: memref<16x8xf32, #tpu.memory_space<vmem>>, %arg11: memref<1x8xf32, #tpu.memory_space<vmem>>, %arg12: memref<1x16x8xf32, #tpu.memory_space<vmem>>) attributes {dimension_semantics = [#tpu.dimension_semantics<parallel>], iteration_bounds = array<i64: 2>, scalar_prefetch = 0 : i64, scratch_operands = 0 : i64, tpu.core_type = #tpu.core_type<tc>, window_params = [{transform_indices = @transform_0, window_bounds = array<i64: 1, 64, 16>}, {pipeline_mode = #tpu.pipeline_mode<synchronous>, transform_indices = @transform_1, window_bounds = array<i64: 16, 48>}, {pipeline_mode = #tpu.pipeline_mode<synchronous>, transform_indices = @transform_2, window_bounds = array<i64: 1, 48>}, {pipeline_mode = #tpu.pipeline_mode<synchronous>, transform_indices = @transform_3, window_bounds = array<i64: 48, 8>}, {pipeline_mode = #tpu.pipeline_mode<synchronous>, transform_indices = @transform_4, window_bounds = array<i64: 1, 8>}, {pipeline_mode = #tpu.pipeline_mode<synchronous>, transform_indices = @transform_5, window_bounds = array<i64: 48, 8>}, {pipeline_mode = #tpu.pipeline_mode<synchronous>, transform_indices = @transform_6, window_bounds = array<i64: 1, 8>}, {pipeline_mode = #tpu.pipeline_mode<synchronous>, transform_indices = @transform_7, window_bounds = array<i64: 8, 16>}, {pipeline_mode = #tpu.pipeline_mode<synchronous>, transform_indices = @transform_8, window_bounds = array<i64: 1, 16>}, {pipeline_mode = #tpu.pipeline_mode<synchronous>, transform_indices = @transform_9, window_bounds = array<i64: 16, 8>}, {pipeline_mode = #tpu.pipeline_mode<synchronous>, transform_indices = @transform_10, window_bounds = array<i64: 1, 8>}, {transform_indices = @transform_11, window_bounds = array<i64: 1, 16, 8>}]} {
    %c0 = arith.constant 0 : index
    %c0_0 = arith.constant 0 : index
    %c0_1 = arith.constant 0 : index
    %0 = vector.load %arg1[%c0, %c0_0, %c0_1] : memref<1x64x16xf32, #tpu.memory_space<vmem>>, vector<1x64x16xf32>
    %1 = vector.shape_cast %0 : vector<1x64x16xf32> to vector<64x16xf32>
    %c0_2 = arith.constant 0 : index
    %c0_3 = arith.constant 0 : index
    %2 = vector.load %arg2[%c0_2, %c0_3] : memref<16x48xf32, #tpu.memory_space<vmem>>, vector<16x48xf32>
    %cst = arith.constant dense<0.000000e+00> : vector<64x48xf32>
    %3 = tpu.matmul %1, %2, %cst {dimension_numbers = #tpu.dot_dimension_numbers<[1], [0], [0], [1], [0, 0, 1, 1], [], []>} : vector<64x16xf32>, vector<16x48xf32>, vector<64x48xf32> -> vector<64x48xf32>
    %c0_4 = arith.constant 0 : index
    %c0_5 = arith.constant 0 : index
    %4 = vector.load %arg3[%c0_4, %c0_5] : memref<1x48xf32, #tpu.memory_space<vmem>>, vector<1x48xf32>
    %5 = vector.broadcast %4 : vector<1x48xf32> to vector<64x48xf32>
    %6 = arith.addf %3, %5 : vector<64x48xf32>
    %cst_6 = arith.constant 0.000000e+00 : f32
    %7 = vector.broadcast %cst_6 : f32 to vector<64x48xf32>
    %8 = arith.cmpf ogt, %6, %7 : vector<64x48xf32>
    %cst_7 = arith.constant 0.00999999977 : f32
    %9 = vector.broadcast %cst_7 : f32 to vector<64x48xf32>
    %10 = arith.mulf %9, %6 : vector<64x48xf32>
    %11 = arith.select %8, %6, %10 : vector<64x48xi1>, vector<64x48xf32>
    %c0_8 = arith.constant 0 : index
    %c0_9 = arith.constant 0 : index
    %12 = vector.load %arg4[%c0_8, %c0_9] : memref<48x8xf32, #tpu.memory_space<vmem>>, vector<48x8xf32>
    %cst_10 = arith.constant dense<0.000000e+00> : vector<64x8xf32>
    %13 = tpu.matmul %11, %12, %cst_10 {dimension_numbers = #tpu.dot_dimension_numbers<[1], [0], [0], [1], [0, 0, 1, 1], [], []>} : vector<64x48xf32>, vector<48x8xf32>, vector<64x8xf32> -> vector<64x8xf32>
    %c0_11 = arith.constant 0 : index
    %c0_12 = arith.constant 0 : index
    %14 = vector.load %arg5[%c0_11, %c0_12] : memref<1x8xf32, #tpu.memory_space<vmem>>, vector<1x8xf32>
    %15 = vector.broadcast %14 : vector<1x8xf32> to vector<64x8xf32>
    %16 = arith.addf %13, %15 : vector<64x8xf32>
    %c0_13 = arith.constant 0 : index
    %c0_14 = arith.constant 0 : index
    %17 = vector.load %arg6[%c0_13, %c0_14] : memref<48x8xf32, #tpu.memory_space<vmem>>, vector<48x8xf32>
    %cst_15 = arith.constant dense<0.000000e+00> : vector<64x8xf32>
    %18 = tpu.matmul %11, %17, %cst_15 {dimension_numbers = #tpu.dot_dimension_numbers<[1], [0], [0], [1], [0, 0, 1, 1], [], []>} : vector<64x48xf32>, vector<48x8xf32>, vector<64x8xf32> -> vector<64x8xf32>
    %c0_16 = arith.constant 0 : index
    %c0_17 = arith.constant 0 : index
    %19 = vector.load %arg7[%c0_16, %c0_17] : memref<1x8xf32, #tpu.memory_space<vmem>>, vector<1x8xf32>
    %20 = vector.broadcast %19 : vector<1x8xf32> to vector<64x8xf32>
    %21 = arith.addf %18, %20 : vector<64x8xf32>
    %c0_18 = arith.constant 0 : index
    %c0_19 = arith.constant 0 : index
    %22 = vector.load %arg8[%c0_18, %c0_19] : memref<8x16xf32, #tpu.memory_space<vmem>>, vector<8x16xf32>
    %cst_20 = arith.constant dense<0.000000e+00> : vector<64x16xf32>
    %23 = tpu.matmul %16, %22, %cst_20 {dimension_numbers = #tpu.dot_dimension_numbers<[1], [0], [0], [1], [0, 0, 1, 1], [], []>} : vector<64x8xf32>, vector<8x16xf32>, vector<64x16xf32> -> vector<64x16xf32>
    %c0_21 = arith.constant 0 : index
    %c0_22 = arith.constant 0 : index
    %24 = vector.load %arg9[%c0_21, %c0_22] : memref<1x16xf32, #tpu.memory_space<vmem>>, vector<1x16xf32>
    %25 = vector.broadcast %24 : vector<1x16xf32> to vector<64x16xf32>
    %26 = arith.addf %23, %25 : vector<64x16xf32>
    %cst_23 = arith.constant 0.000000e+00 : f32
    %27 = vector.broadcast %cst_23 : f32 to vector<64x16xf32>
    %28 = arith.cmpf ogt, %26, %27 : vector<64x16xf32>
    %cst_24 = arith.constant 0.00999999977 : f32
    %29 = vector.broadcast %cst_24 : f32 to vector<64x16xf32>
    %30 = arith.mulf %29, %26 : vector<64x16xf32>
    %31 = arith.select %28, %26, %30 : vector<64x16xi1>, vector<64x16xf32>
    %c0_25 = arith.constant 0 : index
    %c0_26 = arith.constant 0 : index
    %32 = vector.load %arg10[%c0_25, %c0_26] : memref<16x8xf32, #tpu.memory_space<vmem>>, vector<16x8xf32>
    %cst_27 = arith.constant dense<0.000000e+00> : vector<64x8xf32>
    %33 = tpu.matmul %31, %32, %cst_27 {dimension_numbers = #tpu.dot_dimension_numbers<[1], [0], [0], [1], [0, 0, 1, 1], [], []>} : vector<64x16xf32>, vector<16x8xf32>, vector<64x8xf32> -> vector<64x8xf32>
    %c0_28 = arith.constant 0 : index
    %c0_29 = arith.constant 0 : index
    %34 = vector.load %arg11[%c0_28, %c0_29] : memref<1x8xf32, #tpu.memory_space<vmem>>, vector<1x8xf32>
    %35 = vector.broadcast %34 : vector<1x8xf32> to vector<64x8xf32>
    %36 = arith.addf %33, %35 : vector<64x8xf32>
    %cst_30 = arith.constant dense<0xFF800000> : vector<64xf32>
    %37 = vector.multi_reduction <maximumf>, %36, %cst_30 [1] : vector<64x8xf32> to vector<64xf32>
    %38 = vector.shape_cast %37 : vector<64xf32> to vector<64x1xf32>
    %39 = vector.broadcast %38 : vector<64x1xf32> to vector<64x8xf32>
    %40 = arith.subf %36, %39 : vector<64x8xf32>
    %41 = math.exp %40 : vector<64x8xf32>
    %cst_31 = arith.constant dense<0.000000e+00> : vector<64xf32>
    %42 = vector.multi_reduction <add>, %41, %cst_31 [1] : vector<64x8xf32> to vector<64xf32>
    %43 = vector.shape_cast %42 : vector<64xf32> to vector<64x1xf32>
    %44 = vector.broadcast %43 : vector<64x1xf32> to vector<64x8xf32>
    %45 = arith.divf %41, %44 : vector<64x8xf32>
    %46 = arith.mulf %45, %21 : vector<64x8xf32>
    %47 = vector.shape_cast %46 : vector<64x8xf32> to vector<1x4x16x8xf32>
    %cst_32 = arith.constant dense<0.000000e+00> : vector<1x16x8xf32>
    %48 = vector.multi_reduction <add>, %47, %cst_32 [1] : vector<1x4x16x8xf32> to vector<1x16x8xf32>
    %c0_33 = arith.constant 0 : index
    %c0_34 = arith.constant 0 : index
    %c0_35 = arith.constant 0 : index
    %49 = vector.load %arg12[%c0_33, %c0_34, %c0_35] : memref<1x16x8xf32, #tpu.memory_space<vmem>>, vector<1x16x8xf32>
    tpu.vector_store %arg12[%c0_33, %c0_34, %c0_35], %48 {strides = array<i32>} : memref<1x16x8xf32, #tpu.memory_space<vmem>>, vector<1x16x8xf32>,
    return
  }
  func.func @transform_0(%arg0: i32) -> (i32, i32, i32) {
    %c0_i32 = arith.constant 0 : i32
    %c0_i32_0 = arith.constant 0 : i32
    %c0_i32_1 = arith.constant 0 : i32
    return %arg0, %c0_i32, %c0_i32_0 : i32, i32, i32
  }
  func.func @transform_1(%arg0: i32) -> (i32, i32) {
    %c0_i32 = arith.constant 0 : i32
    %c0_i32_0 = arith.constant 0 : i32
    %c0_i32_1 = arith.constant 0 : i32
    return %c0_i32, %c0_i32_0 : i32, i32
  }
  func.func @transform_2(%arg0: i32) -> (i32, i32) {
    %c0_i32 = arith.constant 0 : i32
    %c0_i32_0 = arith.constant 0 : i32
    %c0_i32_1 = arith.constant 0 : i32
    return %c0_i32, %c0_i32_0 : i32, i32
  }
  func.func @transform_3(%arg0: i32) -> (i32, i32) {
    %c0_i32 = arith.constant 0 : i32
    %c0_i32_0 = arith.constant 0 : i32
    %c0_i32_1 = arith.constant 0 : i32
    return %c0_i32, %c0_i32_0 : i32, i32
  }
  func.func @transform_4(%arg0: i32) -> (i32, i32) {
    %c0_i32 = arith.constant 0 : i32
    %c0_i32_0 = arith.constant 0 : i32
    %c0_i32_1 = arith.constant 0 : i32
    return %c0_i32, %c0_i32_0 : i32, i32
  }
  func.func @transform_5(%arg0: i32) -> (i32, i32) {
    %c0_i32 = arith.constant 0 : i32
    %c0_i32_0 = arith.constant 0 : i32
    %c0_i32_1 = arith.constant 0 : i32
    return %c0_i32, %c0_i32_0 : i32, i32
  }
  func.func @transform_6(%arg0: i32) -> (i32, i32) {
    %c0_i32 = arith.constant 0 : i32
    %c0_i32_0 = arith.constant 0 : i32
    %c0_i32_1 = arith.constant 0 : i32
    return %c0_i32, %c0_i32_0 : i32, i32
  }
  func.func @transform_7(%arg0: i32) -> (i32, i32) {
    %c0_i32 = arith.constant 0 : i32
    %c0_i32_0 = arith.constant 0 : i32
    %c0_i32_1 = arith.constant 0 : i32
    return %c0_i32, %c0_i32_0 : i32, i32
  }
  func.func @transform_8(%arg0: i32) -> (i32, i32) {
    %c0_i32 = arith.constant 0 : i32
    %c0_i32_0 = arith.constant 0 : i32
    %c0_i32_1 = arith.constant 0 : i32
    return %c0_i32, %c0_i32_0 : i32, i32
  }
  func.func @transform_9(%arg0: i32) -> (i32, i32) {
    %c0_i32 = arith.constant 0 : i32
    %c0_i32_0 = arith.constant 0 : i32
    %c0_i32_1 = arith.constant 0 : i32
    return %c0_i32, %c0_i32_0 : i32, i32
  }
  func.func @transform_10(%arg0: i32) -> (i32, i32) {
    %c0_i32 = arith.constant 0 : i32
    %c0_i32_0 = arith.constant 0 : i32
    %c0_i32_1 = arith.constant 0 : i32
    return %c0_i32, %c0_i32_0 : i32, i32
  }
  func.func @transform_11(%arg0: i32) -> (i32, i32, i32) {
    %c0_i32 = arith.constant 0 : i32
    %c0_i32_0 = arith.constant 0 : i32
    %c0_i32_1 = arith.constant 0 : i32
    return %arg0, %c0_i32, %c0_i32_0 : i32, i32, i32
  }
}

</mosaic_0001>

<llo_original>
// kernel: attention_in_pnts.1
$region0: #{attention_in_pnts.1}
  #allocation0 [shape = 'u32[]', space=smem, size = 0x4, offset = 0x4, fixed_abs, tag = 'smem constant byte address 0x4 - core index']
  #allocation1 [shape = 'u32[144,128]{1,0:T(1,128)}', space=vmem, size = 0x12000, scoped, tag = 'internal scratch']
  %s0 = inlined_call_operand.vmem [shape: f32[2,64,16], index: 0, kind: input, shape index: {}]
  %s1 = inlined_call_operand.vmem [shape: f32[16,48], index: 1, kind: input, shape index: {}]
  %s2 = inlined_call_operand.vmem [shape: f32[1,48], index: 2, kind: input, shape index: {}]
  %s3 = inlined_call_operand.vmem [shape: f32[48,8], index: 3, kind: input, shape index: {}]
  %s4 = inlined_call_operand.vmem [shape: f32[1,8], index: 4, kind: input, shape index: {}]
  %s5 = inlined_call_operand.vmem [shape: f32[48,8], index: 5, kind: input, shape index: {}]
  %s6 = inlined_call_operand.vmem [shape: f32[1,8], index: 6, kind: input, shape index: {}]
  %s7 = inlined_call_operand.vmem [shape: f32[8,16], index: 7, kind: input, shape index: {}]
  %s8 = inlined_call_operand.vmem [shape: f32[1,16], index: 8, kind: input, shape index: {}]
  %s9 = inlined_call_operand.vmem [shape: f32[16,8], index: 9, kind: input, shape index: {}]
  %s10 = inlined_call_operand.vmem [shape: f32[1,8], index: 10, kind: input, shape index: {}]
  %s11 = inlined_call_operand.vmem [shape: f32[2,16,8], index: 11, kind: output, shape index: {}]
  %s12 = sld [smem:[#allocation0]]
  $region77: #{attention_in_pnts.1} parent=0
    _
  %s14 = ssub.s32 1, %s12
  %s15 = scalar_select 0, %s14, %s12
  loop: start=0, step=1, limit=4
  $region2: #{attention_in_pnts.1} parent=0 // loop_pre_header
    _
  $region3: #{attention_in_pnts.1} parent=0 // loop_header
    %s17 = sphi 0, %s21
    %p18 = scmp.ge.s32.totalorder %s17, 4
    %s27 = sphi 0, %s29
    %s30 = sphi 0, %s27
    %s31 = sphi 0, %s30
    %s47 = sphi 0, %s31
    %s51 = sphi 0, %s51
    %s53 = sphi 0, %s51
    %s54 = sphi 0, %s53
    %s68 = sphi 0, %s54
    %s72 = sphi 0, %s72
    %s74 = sphi 0, %s72
    %s75 = sphi 0, %s74
    %s89 = sphi 0, %s75
    %s93 = sphi 0, %s93
    %s95 = sphi 0, %s93
    %s96 = sphi 0, %s95
    %s110 = sphi 0, %s96
    %s114 = sphi 0, %s114
    %s116 = sphi 0, %s114
    %s117 = sphi 0, %s116
    %s131 = sphi 0, %s117
    %s135 = sphi 0, %s135
    %s137 = sphi 0, %s135
    %s138 = sphi 0, %s137
    %s152 = sphi 0, %s138
    %s156 = sphi 0, %s156
    %s158 = sphi 0, %s156
    %s159 = sphi 0, %s158
    %s173 = sphi 0, %s159
    %s177 = sphi 0, %s177
    %s179 = sphi 0, %s177
    %s180 = sphi 0, %s179
    %s194 = sphi 0, %s180
    %s198 = sphi 0, %s198
    %s200 = sphi 0, %s198
    %s201 = sphi 0, %s200
    %s215 = sphi 0, %s201
    %s219 = sphi 0, %s219
    %s221 = sphi 0, %s219
    %s222 = sphi 0, %s221
    %s236 = sphi 0, %s222
    %s240 = sphi 0, %s240
    %s242 = sphi 0, %s240
    %s243 = sphi 0, %s242
    %s257 = sphi 0, %s243
    %s263 = sphi 0, %s265
    %s266 = sphi 0, %s263
    %s267 = sphi 0, %s266
    %s283 = sphi 0, %s267
  $region4: #{attention_in_pnts.1} parent=0 // loop_header_branch
    %20 = sbr.rel (%p18) target = $region8
  $region5: #{attention_in_pnts.1} parent=0 // loop_body
    %s22 = ssub.s32 %s17, 1
    %s23 = ssub.s32 %s17, 2
    %s24 = sadd.s32 %s17, 1
    %s25 = ssub.s32 %s17, %s24
    %p26 = scmp.eq.s32.totalorder %s25, 0
    %s28 = sadd.s32 %s27, 1
    %s29 = scalar_select %p26, %s27, %s28
    %p32 = pneg %p26
    %p33 = scmp.eq.s32.totalorder %s17, 1
    %p34 = por %p32, %p33
    %p35 = scmp.ne.s32.totalorder %s27, %s30
    %p36 = scmp.eq.s32.totalorder %s17, 0
    %p37 = por %p35, %p36
    %p38 = scmp.ne.s32.totalorder %s27, %s30
    %p39 = scmp.eq.s32.totalorder %s22, 1
    %p40 = por %p38, %p39
    %p41 = scmp.ne.s32.totalorder %s30, %s31
    %p42 = scmp.eq.s32.totalorder %s22, 0
    %p43 = por %p41, %p42
    %p44 = scmp.ne.s32.totalorder %s30, %s31
    %p45 = scmp.eq.s32.totalorder %s23, 1
    %p46 = por %p44, %p45
    %p48 = scmp.ne.s32.totalorder %s31, %s47
    %p49 = scmp.eq.s32.totalorder %s23, 0
    %p50 = por %p48, %p49
    %s52 = sadd.s32 %s51, 1
    %p55 = scmp.eq.s32.totalorder %s17, 1
    %p56 = scmp.ne.s32.totalorder %s51, %s53
    %p57 = scmp.eq.s32.totalorder %s17, 0
    %p58 = por %p56, %p57
    %p59 = scmp.ne.s32.totalorder %s51, %s53
    %p60 = scmp.eq.s32.totalorder %s22, 1
    %p61 = por %p59, %p60
    %p62 = scmp.ne.s32.totalorder %s53, %s54
    %p63 = scmp.eq.s32.totalorder %s22, 0
    %p64 = por %p62, %p63
    %p65 = scmp.ne.s32.totalorder %s53, %s54
    %p66 = scmp.eq.s32.totalorder %s23, 1
    %p67 = por %p65, %p66
    %p69 = scmp.ne.s32.totalorder %s54, %s68
    %p70 = scmp.eq.s32.totalorder %s23, 0
    %p71 = por %p69, %p70
    %s73 = sadd.s32 %s72, 1
    %p76 = scmp.eq.s32.totalorder %s17, 1
    %p77 = scmp.ne.s32.totalorder %s72, %s74
    %p78 = scmp.eq.s32.totalorder %s17, 0
    %p79 = por %p77, %p78
    %p80 = scmp.ne.s32.totalorder %s72, %s74
    %p81 = scmp.eq.s32.totalorder %s22, 1
    %p82 = por %p80, %p81
    %p83 = scmp.ne.s32.totalorder %s74, %s75
    %p84 = scmp.eq.s32.totalorder %s22, 0
    %p85 = por %p83, %p84
    %p86 = scmp.ne.s32.totalorder %s74, %s75
    %p87 = scmp.eq.s32.totalorder %s23, 1
    %p88 = por %p86, %p87
    %p90 = scmp.ne.s32.totalorder %s75, %s89
    %p91 = scmp.eq.s32.totalorder %s23, 0
    %p92 = por %p90, %p91
    %s94 = sadd.s32 %s93, 1
    %p97 = scmp.eq.s32.totalorder %s17, 1
    %p98 = scmp.ne.s32.totalorder %s93, %s95
    %p99 = scmp.eq.s32.totalorder %s17, 0
    %p100 = por %p98, %p99
    %p101 = scmp.ne.s32.totalorder %s93, %s95
    %p102 = scmp.eq.s32.totalorder %s22, 1
    %p103 = por %p101, %p102
    %p104 = scmp.ne.s32.totalorder %s95, %s96
    %p105 = scmp.eq.s32.totalorder %s22, 0
    %p106 = por %p104, %p105
    %p107 = scmp.ne.s32.totalorder %s95, %s96
    %p108 = scmp.eq.s32.totalorder %s23, 1
    %p109 = por %p107, %p108
    %p111 = scmp.ne.s32.totalorder %s96, %s110
    %p112 = scmp.eq.s32.totalorder %s23, 0
    %p113 = por %p111, %p112
    %s115 = sadd.s32 %s114, 1
    %p118 = scmp.eq.s32.totalorder %s17, 1
    %p119 = scmp.ne.s32.totalorder %s114, %s116
    %p120 = scmp.eq.s32.totalorder %s17, 0
    %p121 = por %p119, %p120
    %p122 = scmp.ne.s32.totalorder %s114, %s116
    %p123 = scmp.eq.s32.totalorder %s22, 1
    %p124 = por %p122, %p123
    %p125 = scmp.ne.s32.totalorder %s116, %s117
    %p126 = scmp.eq.s32.totalorder %s22, 0
    %p127 = por %p125, %p126
    %p128 = scmp.ne.s32.totalorder %s116, %s117
    %p129 = scmp.eq.s32.totalorder %s23, 1
    %p130 = por %p128, %p129
    %p132 = scmp.ne.s32.totalorder %s117, %s131
    %p133 = scmp.eq.s32.totalorder %s23, 0
    %p134 = por %p132, %p133
    %s136 = sadd.s32 %s135, 1
    %p139 = scmp.eq.s32.totalorder %s17, 1
    %p140 = scmp.ne.s32.totalorder %s135, %s137
    %p141 = scmp.eq.s32.totalorder %s17, 0
    %p142 = por %p140, %p141
    %p143 = scmp.ne.s32.totalorder %s135, %s137
    %p144 = scmp.eq.s32.totalorder %s22, 1
    %p145 = por %p143, %p144
    %p146 = scmp.ne.s32.totalorder %s137, %s138
    %p147 = scmp.eq.s32.totalorder %s22, 0
    %p148 = por %p146, %p147
    %p149 = scmp.ne.s32.totalorder %s137, %s138
    %p150 = scmp.eq.s32.totalorder %s23, 1
    %p151 = por %p149, %p150
    %p153 = scmp.ne.s32.totalorder %s138, %s152
    %p154 = scmp.eq.s32.totalorder %s23, 0
    %p155 = por %p153, %p154
    %s157 = sadd.s32 %s156, 1
    %p160 = scmp.eq.s32.totalorder %s17, 1
    %p161 = scmp.ne.s32.totalorder %s156, %s158
    %p162 = scmp.eq.s32.totalorder %s17, 0
    %p163 = por %p161, %p162
    %p164 = scmp.ne.s32.totalorder %s156, %s158
    %p165 = scmp.eq.s32.totalorder %s22, 1
    %p166 = por %p164, %p165
    %p167 = scmp.ne.s32.totalorder %s158, %s159
    %p168 = scmp.eq.s32.totalorder %s22, 0
    %p169 = por %p167, %p168
    %p170 = scmp.ne.s32.totalorder %s158, %s159
    %p171 = scmp.eq.s32.totalorder %s23, 1
    %p172 = por %p170, %p171
    %p174 = scmp.ne.s32.totalorder %s159, %s173
    %p175 = scmp.eq.s32.totalorder %s23, 0
    %p176 = por %p174, %p175
    %s178 = sadd.s32 %s177, 1
    %p181 = scmp.eq.s32.totalorder %s17, 1
    %p182 = scmp.ne.s32.totalorder %s177, %s179
    %p183 = scmp.eq.s32.totalorder %s17, 0
    %p184 = por %p182, %p183
    %p185 = scmp.ne.s32.totalorder %s177, %s179
    %p186 = scmp.eq.s32.totalorder %s22, 1
    %p187 = por %p185, %p186
    %p188 = scmp.ne.s32.totalorder %s179, %s180
    %p189 = scmp.eq.s32.totalorder %s22, 0
    %p190 = por %p188, %p189
    %p191 = scmp.ne.s32.totalorder %s179, %s180
    %p192 = scmp.eq.s32.totalorder %s23, 1
    %p193 = por %p191, %p192
    %p195 = scmp.ne.s32.totalorder %s180, %s194
    %p196 = scmp.eq.s32.totalorder %s23, 0
    %p197 = por %p195, %p196
    %s199 = sadd.s32 %s198, 1
    %p202 = scmp.eq.s32.totalorder %s17, 1
    %p203 = scmp.ne.s32.totalorder %s198, %s200
    %p204 = scmp.eq.s32.totalorder %s17, 0
    %p205 = por %p203, %p204
    %p206 = scmp.ne.s32.totalorder %s198, %s200
    %p207 = scmp.eq.s32.totalorder %s22, 1
    %p208 = por %p206, %p207
    %p209 = scmp.ne.s32.totalorder %s200, %s201
    %p210 = scmp.eq.s32.totalorder %s22, 0
    %p211 = por %p209, %p210
    %p212 = scmp.ne.s32.totalorder %s200, %s201
    %p213 = scmp.eq.s32.totalorder %s23, 1
    %p214 = por %p212, %p213
    %p216 = scmp.ne.s32.totalorder %s201, %s215
    %p217 = scmp.eq.s32.totalorder %s23, 0
    %p218 = por %p216, %p217
    %s220 = sadd.s32 %s219, 1
    %p223 = scmp.eq.s32.totalorder %s17, 1
    %p224 = scmp.ne.s32.totalorder %s219, %s221
    %p225 = scmp.eq.s32.totalorder %s17, 0
    %p226 = por %p224, %p225
    %p227 = scmp.ne.s32.totalorder %s219, %s221
    %p228 = scmp.eq.s32.totalorder %s22, 1
    %p229 = por %p227, %p228
    %p230 = scmp.ne.s32.totalorder %s221, %s222
    %p231 = scmp.eq.s32.totalorder %s22, 0
    %p232 = por %p230, %p231
    %p233 = scmp.ne.s32.totalorder %s221, %s222
    %p234 = scmp.eq.s32.totalorder %s23, 1
    %p235 = por %p233, %p234
    %p237 = scmp.ne.s32.totalorder %s222, %s236
    %p238 = scmp.eq.s32.totalorder %s23, 0
    %p239 = por %p237, %p238
    %s241 = sadd.s32 %s240, 1
    %p244 = scmp.eq.s32.totalorder %s17, 1
    %p245 = scmp.ne.s32.totalorder %s240, %s242
    %p246 = scmp.eq.s32.totalorder %s17, 0
    %p247 = por %p245, %p246
    %p248 = scmp.ne.s32.totalorder %s240, %s242
    %p249 = scmp.eq.s32.totalorder %s22, 1
    %p250 = por %p248, %p249
    %p251 = scmp.ne.s32.totalorder %s242, %s243
    %p252 = scmp.eq.s32.totalorder %s22, 0
    %p253 = por %p251, %p252
    %p254 = scmp.ne.s32.totalorder %s242, %s243
    %p255 = scmp.eq.s32.totalorder %s23, 1
    %p256 = por %p254, %p255
    %p258 = scmp.ne.s32.totalorder %s243, %s257
    %p259 = scmp.eq.s32.totalorder %s23, 0
    %p260 = por %p258, %p259
    %s261 = ssub.s32 %s17, %s24
    %p262 = scmp.eq.s32.totalorder %s261, 0
    %s264 = sadd.s32 %s263, 1
    %s265 = scalar_select %p262, %s263, %s264
    %p268 = pneg %p262
    %p269 = scmp.eq.s32.totalorder %s17, 1
    %p270 = por %p268, %p269
    %p271 = scmp.ne.s32.totalorder %s263, %s266
    %p272 = scmp.eq.s32.totalorder %s17, 0
    %p273 = por %p271, %p272
    %p274 = scmp.ne.s32.totalorder %s263, %s266
    %p275 = scmp.eq.s32.totalorder %s22, 1
    %p276 = por %p274, %p275
    %p277 = scmp.ne.s32.totalorder %s266, %s267
    %p278 = scmp.eq.s32.totalorder %s22, 0
    %p279 = por %p277, %p278
    %p280 = scmp.ne.s32.totalorder %s266, %s267
    %p281 = scmp.eq.s32.totalorder %s23, 1
    %p282 = por %p280, %p281
    %p284 = scmp.ne.s32.totalorder %s267, %s283
    %p285 = scmp.eq.s32.totalorder %s23, 0
    %p286 = por %p284, %p285
    %p287 = scmp.le.s32.totalorder 1, %s17
    %p288 = scmp.lt.s32.totalorder %s17, 3
    %p289 = pnand %p287, %p288
    %p290 = pneg %p289
    // Predicated region
    $region9: #{attention_in_pnts.1} parent=5 // pred_check
      _
    $region10: #{attention_in_pnts.1} parent=5 // pred_check_branch
      %292 = sbr.rel (%p289) target = $region12
    $region11: #{attention_in_pnts.1} parent=5 // pred_region
      %s293 = ssub.s32 %s17, 1
      // Predicated region
      $region13: #{attention_in_pnts.1} parent=11 // pred_check
        %p294 = pneg %p64
      $region14: #{attention_in_pnts.1} parent=11 // pred_check_branch
        %296 = sbr.rel (%p294) target = $region16
      $region15: #{attention_in_pnts.1} parent=11 // pred_region
        _
      $region16: #{attention_in_pnts.1} parent=11 // pred_fallthru
        _
      // Predicated region
      $region17: #{attention_in_pnts.1} parent=11 // pred_check
        %p297 = pneg %p85
      $region18: #{attention_in_pnts.1} parent=11 // pred_check_branch
        %299 = sbr.rel (%p297) target = $region20
      $region19: #{attention_in_pnts.1} parent=11 // pred_region
        _
      $region20: #{attention_in_pnts.1} parent=11 // pred_fallthru
        _
      // Predicated region
      $region21: #{attention_in_pnts.1} parent=11 // pred_check
        %p300 = pneg %p106
      $region22: #{attention_in_pnts.1} parent=11 // pred_check_branch
        %302 = sbr.rel (%p300) target = $region24
      $region23: #{attention_in_pnts.1} parent=11 // pred_region
        _
      $region24: #{attention_in_pnts.1} parent=11 // pred_fallthru
        _
      // Predicated region
      $region25: #{attention_in_pnts.1} parent=11 // pred_check
        %p303 = pneg %p127
      $region26: #{attention_in_pnts.1} parent=11 // pred_check_branch
        %305 = sbr.rel (%p303) target = $region28
      $region27: #{attention_in_pnts.1} parent=11 // pred_region
        _
      $region28: #{attention_in_pnts.1} parent=11 // pred_fallthru
        _
      // Predicated region
      $region29: #{attention_in_pnts.1} parent=11 // pred_check
        %p306 = pneg %p148
      $region30: #{attention_in_pnts.1} parent=11 // pred_check_branch
        %308 = sbr.rel (%p306) target = $region32
      $region31: #{attention_in_pnts.1} parent=11 // pred_region
        _
      $region32: #{attention_in_pnts.1} parent=11 // pred_fallthru
        _
      // Predicated region
      $region33: #{attention_in_pnts.1} parent=11 // pred_check
        %p309 = pneg %p169
      $region34: #{attention_in_pnts.1} parent=11 // pred_check_branch
        %311 = sbr.rel (%p309) target = $region36
      $region35: #{attention_in_pnts.1} parent=11 // pred_region
        _
      $region36: #{attention_in_pnts.1} parent=11 // pred_fallthru
        _
      // Predicated region
      $region37: #{attention_in_pnts.1} parent=11 // pred_check
        %p312 = pneg %p190
      $region38: #{attention_in_pnts.1} parent=11 // pred_check_branch
        %314 = sbr.rel (%p312) target = $region40
      $region39: #{attention_in_pnts.1} parent=11 // pred_region
        _
      $region40: #{attention_in_pnts.1} parent=11 // pred_fallthru
        _
      // Predicated region
      $region41: #{attention_in_pnts.1} parent=11 // pred_check
        %p315 = pneg %p211
      $region42: #{attention_in_pnts.1} parent=11 // pred_check_branch
        %317 = sbr.rel (%p315) target = $region44
      $region43: #{attention_in_pnts.1} parent=11 // pred_region
        _
      $region44: #{attention_in_pnts.1} parent=11 // pred_fallthru
        _
      // Predicated region
      $region45: #{attention_in_pnts.1} parent=11 // pred_check
        %p318 = pneg %p232
      $region46: #{attention_in_pnts.1} parent=11 // pred_check_branch
        %320 = sbr.rel (%p318) target = $region48
      $region47: #{attention_in_pnts.1} parent=11 // pred_region
        _
      $region48: #{attention_in_pnts.1} parent=11 // pred_fallthru
        _
      // Predicated region
      $region49: #{attention_in_pnts.1} parent=11 // pred_check
        %p321 = pneg %p253
      $region50: #{attention_in_pnts.1} parent=11 // pred_check_branch
        %323 = sbr.rel (%p321) target = $region52
      $region51: #{attention_in_pnts.1} parent=11 // pred_region
        _
      $region52: #{attention_in_pnts.1} parent=11 // pred_fallthru
        _
    $region12: #{attention_in_pnts.1} parent=5 // pred_fallthru
      _
    %p324 = scmp.lt.s32.totalorder %s17, 2
    // Predicated region
    $region53: #{attention_in_pnts.1} parent=5 // pred_check
      %p325 = pneg %p324
    $region54: #{attention_in_pnts.1} parent=5 // pred_check_branch
      %327 = sbr.rel (%p325) target = $region56
    $region55: #{attention_in_pnts.1} parent=5 // pred_region
      // Predicated region
      $region57: #{attention_in_pnts.1} parent=55 // pred_check
        %p328 = pneg %p37
      $region58: #{attention_in_pnts.1} parent=55 // pred_check_branch
        %330 = sbr.rel (%p328) target = $region60
      $region59: #{attention_in_pnts.1} parent=55 // pred_region
        %p331 = scmp.lt.s32.totalorder %s17, 1
        %s332 = scalar_select %p331, %s17, 1
        %s333 = smul.addr %s332, 8
        %s334 = smul.addr %s333, 8
        %s335 = scalar_lea.vmem %s0, %s334
      $region60: #{attention_in_pnts.1} parent=55 // pred_fallthru
        _
    $region56: #{attention_in_pnts.1} parent=5 // pred_fallthru
      _
    %p336 = scmp.le.s32.totalorder 1, %s17
    %p337 = scmp.lt.s32.totalorder %s17, 3
    %p338 = pnand %p336, %p337
    %p339 = pneg %p338
    // Predicated region
    $region61: #{attention_in_pnts.1} parent=5 // pred_check
      _
    $region62: #{attention_in_pnts.1} parent=5 // pred_check_branch
      %341 = sbr.rel (%p338) target = $region64
    $region63: #{attention_in_pnts.1} parent=5 // pred_region
      %s342 = ssub.s32 %s17, 1
      %p343 = scmp.lt.s32.totalorder %s22, 1
      %s344 = scalar_select %p343, %s22, 1
      %s345 = smul.addr %s344, 8
      %s346 = smul.addr %s345, 8
      %s347 = scalar_lea.vmem %s0, %s346
      %p348 = pneg %p43
      %p349 = pneg %p40
      %p350 = pneg %p64
      %p351 = pneg %p61
      %p352 = pneg %p85
      %p353 = pneg %p82
      %p354 = pneg %p106
      %p355 = pneg %p103
      %p356 = pneg %p127
      %p357 = pneg %p124
      %p358 = pneg %p148
      %p359 = pneg %p145
      %p360 = pneg %p169
      %p361 = pneg %p166
      %p362 = pneg %p190
      %p363 = pneg %p187
      %p364 = pneg %p211
      %p365 = pneg %p208
      %p366 = pneg %p232
      %p367 = pneg %p229
      %p368 = pneg %p253
      %p369 = pneg %p250
      %p370 = pneg %p279
      %p371 = pneg %p276
      %p372 = scmp.lt.s32.totalorder %s22, 1
      %s373 = scalar_select %p372, %s22, 1
      %s374 = smul.addr %s373, 2
      %s375 = smul.addr %s374, 8
      %s376 = scalar_lea.vmem %s11, %s375
      %p377 = scmp.lt.s32.totalorder %s22, 1
      %s378 = scalar_select %p377, %s22, 1
      %s379 = smul.addr %s378, 8
      %s380 = smul.addr %s379, 8
      %s381 = scalar_lea.vmem %s0, %s380
      %p382 = scmp.lt.s32.totalorder %s22, 1
      %s383 = scalar_select %p382, %s22, 1
      %s384 = smul.addr %s383, 2
      %s385 = smul.addr %s384, 8
      %s386 = scalar_lea.vmem %s11, %s385
      %v387 = vld [vmem:[%s381] sm:$0xff]
      %v388 = vld [vmem:[%s381 + $0x8] sm:$0xff]
      %v389 = vld [vmem:[%s381 + $0x10] sm:$0xff]
      %v390 = vld [vmem:[%s381 + $0x18] sm:$0xff]
      %v391 = vld [vmem:[%s381 + $0x20] sm:$0xff]
      %v392 = vld [vmem:[%s381 + $0x28] sm:$0xff]
      %v393 = vld [vmem:[%s381 + $0x30] sm:$0xff]
      %v394 = vld [vmem:[%s381 + $0x38] sm:$0xff]
      %v395 = vld [vmem:[%s1] sm:$0xff]
      %v396 = vld [vmem:[%s1 + $0x8] sm:$0xff]
      %v397 = vld [vmem:[%s2] sm:$0x1]
      %v399 = vlaneseq
      %v400 = vshrl.u32 %v399, 7
      %v401 = vsub.s32 0, %v400
      %v402 = vrot.slane %v397, %v401
      %vm404 = vcmask 130048
      %v406 = vsel %vm404, %v387, 0
      %v409 = vsel %vm404, %v388, 0
      %v412 = vsel %vm404, %v389, 0
      %v415 = vsel %vm404, %v390, 0
      %v418 = vsel %vm404, %v391, 0
      %v421 = vsel %vm404, %v392, 0
      %v424 = vsel %vm404, %v393, 0
      %v427 = vsel %vm404, %v394, 0
      %429 = vmatprep.subr.mxu0 0.0
      %430 = vmatpush1.msra.mxu0 %v395
      %431 = vmatprep.subr.mxu0 0.0
      %432 = vmatpush1.msra.mxu0 %v396
      %433 = vmatprep.subr.mxu0 0.0
      %434 = vmatpush1.msra.mxu0 0.0
      %435 = vmatprep.subr.mxu0 0.0
      %436 = vmatpush1.msra.mxu0 0.0
      %437 = vmatprep.subr.mxu0 0.0
      %438 = vmatpush1.msra.mxu0 0.0
      %439 = vmatprep.subr.mxu0 0.0
      %440 = vmatpush1.msra.mxu0 0.0
      %441 = vmatprep.subr.mxu0 0.0
      %442 = vmatpush1.msra.mxu0 0.0
      %443 = vmatprep.subr.mxu0 0.0
      %444 = vmatpush1.msra.mxu0 0.0
      %445 = vmatprep.subr.mxu0 0.0
      %446 = vmatpush1.msra.mxu0 0.0
      %447 = vmatprep.subr.mxu0 0.0
      %448 = vmatpush1.msra.mxu0 0.0
      %449 = vmatprep.subr.mxu0 0.0
      %450 = vmatpush1.msra.mxu0 0.0
      %451 = vmatprep.subr.mxu0 0.0
      %452 = vmatpush1.msra.mxu0 0.0
      %453 = vmatprep.subr.mxu0 0.0
      %454 = vmatpush1.msra.mxu0 0.0
      %455 = vmatprep.subr.mxu0 0.0
      %456 = vmatpush1.msra.mxu0 0.0
      %457 = vmatprep.subr.mxu0 0.0
      %458 = vmatpush1.msra.mxu0 0.0
      %459 = vmatprep.subr.mxu0 0.0
      %460 = vmatpush1.msra.mxu0 0.0
      %461 = vmatprep.subr.mxu0 0.0
      %462 = vmatpush1.msra.mxu0 0.0
      %463 = vmatprep.subr.mxu0 0.0
      %464 = vmatpush1.msra.mxu0 0.0
      %465 = vmatprep.subr.mxu0 0.0
      %466 = vmatpush1.msra.mxu0 0.0
      %467 = vmatprep.subr.mxu0 0.0
      %468 = vmatpush1.msra.mxu0 0.0
      %469 = vmatprep.subr.mxu0 0.0
      %470 = vmatpush1.msra.mxu0 0.0
      %471 = vmatprep.subr.mxu0 0.0
      %472 = vmatpush1.msra.mxu0 0.0
      %473 = vmatprep.subr.mxu0 0.0
      %474 = vmatpush1.msra.mxu0 0.0
      %475 = vmatprep.subr.mxu0 0.0
      %476 = vmatpush1.msra.mxu0 0.0
      %477 = vmatprep.subr.mxu0 0.0
      %478 = vmatpush1.msra.mxu0 0.0
      %479 = vmatprep.subr.mxu0 0.0
      %480 = vmatpush1.msra.mxu0 0.0
      %481 = vmatprep.subr.mxu0 0.0
      %482 = vmatpush1.msra.mxu0 0.0
      %483 = vmatprep.subr.mxu0 0.0
      %484 = vmatpush1.msra.mxu0 0.0
      %485 = vmatprep.subr.mxu0 0.0
      %486 = vmatpush1.msra.mxu0 0.0
      %487 = vmatprep.subr.mxu0 0.0
      %488 = vmatpush1.msra.mxu0 0.0
      %489 = vmatprep.subr.mxu0 0.0
      %490 = vmatpush1.msra.mxu0 0.0
      %491 = vmatprep.subr.mxu0 0.0
      %492 = vmatpush1.msra.mxu0 0.0
      %493 = vmatprep.mubr.f32.mxu0 0.0
      %494 = vmatmul.mubr.f32.gmra.mrb[0].mxu0 %v406
      %v495 = vpop.f32.mrb[0].mxu0
      %v496 = vadd.f32 %v402, %v495
      %v497 = vpop.f32.mrb[0].mxu0
      %498 = vmatprep.mubr.f32.mxu0 0.0
      %499 = vmatmul.mubr.f32.gmra.mrb[0].mxu0 %v409
      %v500 = vpop.f32.mrb[0].mxu0
      %v501 = vadd.f32 %v402, %v500
      %v502 = vpop.f32.mrb[0].mxu0
      %503 = vmatprep.mubr.f32.mxu0 0.0
      %504 = vmatmul.mubr.f32.gmra.mrb[0].mxu0 %v412
      %v505 = vpop.f32.mrb[0].mxu0
      %v506 = vadd.f32 %v402, %v505
      %v507 = vpop.f32.mrb[0].mxu0
      %508 = vmatprep.mubr.f32.mxu0 0.0
      %509 = vmatmul.mubr.f32.gmra.mrb[0].mxu0 %v415
      %v510 = vpop.f32.mrb[0].mxu0
      %v511 = vadd.f32 %v402, %v510
      %v512 = vpop.f32.mrb[0].mxu0
      %513 = vmatprep.mubr.f32.mxu0 0.0
      %514 = vmatmul.mubr.f32.gmra.mrb[0].mxu0 %v418
      %v515 = vpop.f32.mrb[0].mxu0
      %v516 = vadd.f32 %v402, %v515
      %v517 = vpop.f32.mrb[0].mxu0
      %518 = vmatprep.mubr.f32.mxu0 0.0
      %519 = vmatmul.mubr.f32.gmra.mrb[0].mxu0 %v421
      %v520 = vpop.f32.mrb[0].mxu0
      %v521 = vadd.f32 %v402, %v520
      %v522 = vpop.f32.mrb[0].mxu0
      %523 = vmatprep.mubr.f32.mxu0 0.0
      %524 = vmatmul.mubr.f32.gmra.mrb[0].mxu0 %v424
      %v525 = vpop.f32.mrb[0].mxu0
      %v526 = vadd.f32 %v402, %v525
      %v527 = vpop.f32.mrb[0].mxu0
      %528 = vmatprep.mubr.f32.mxu0 0.0
      %529 = vmatmul.mubr.f32.gmra.mrb[0].mxu0 %v427
      %v530 = vpop.f32.mrb[0].mxu0
      %v531 = vadd.f32 %v402, %v530
      %v532 = vpop.f32.mrb[0].mxu0
      %533 = vdwg.mxu0
      %vm534 = vcmp.gt.f32.partialorder %v496, 0.0
      %vm535 = vcmp.gt.f32.partialorder %v501, 0.0
      %vm536 = vcmp.gt.f32.partialorder %v506, 0.0
      %vm537 = vcmp.gt.f32.partialorder %v511, 0.0
      %vm538 = vcmp.gt.f32.partialorder %v516, 0.0
      %vm539 = vcmp.gt.f32.partialorder %v521, 0.0
      %vm540 = vcmp.gt.f32.partialorder %v526, 0.0
      %vm541 = vcmp.gt.f32.partialorder %v531, 0.0
      %v542 = vmul.f32 %v496, 0.01
      %v543 = vmul.f32 %v501, 0.01
      %v544 = vmul.f32 %v506, 0.01
      %v545 = vmul.f32 %v511, 0.01
      %v546 = vmul.f32 %v516, 0.01
      %v547 = vmul.f32 %v521, 0.01
      %v548 = vmul.f32 %v526, 0.01
      %v549 = vmul.f32 %v531, 0.01
      %v550 = vsel %vm534, %v496, %v542
      %v551 = vsel %vm535, %v501, %v543
      %v552 = vsel %vm536, %v506, %v544
      %v553 = vsel %vm537, %v511, %v545
      %v554 = vsel %vm538, %v516, %v546
      %v555 = vsel %vm539, %v521, %v547
      %v556 = vsel %vm540, %v526, %v548
      %v557 = vsel %vm541, %v531, %v549
      %v558 = vld [vmem:[%s3] sm:$0xff]
      %v559 = vld [vmem:[%s3 + $0x8] sm:$0xff]
      %v560 = vld [vmem:[%s3 + $0x10] sm:$0xff]
      %v561 = vld [vmem:[%s3 + $0x18] sm:$0xff]
      %v562 = vld [vmem:[%s3 + $0x20] sm:$0xff]
      %v563 = vld [vmem:[%s3 + $0x28] sm:$0xff]
      %v564 = vld [vmem:[%s4] sm:$0x1]
      %v566 = vlaneseq
      %v567 = vshrl.u32 %v566, 7
      %v568 = vsub.s32 0, %v567
      %v569 = vrot.slane %v564, %v568
      %vm571 = vcmask 392192
      %v573 = vsel %vm571, %v550, 0
      %v576 = vsel %vm571, %v551, 0
      %v579 = vsel %vm571, %v552, 0
      %v582 = vsel %vm571, %v553, 0
      %v585 = vsel %vm571, %v554, 0
      %v588 = vsel %vm571, %v555, 0
      %v591 = vsel %vm571, %v556, 0
      %v594 = vsel %vm571, %v557, 0
      %596 = vmatprep.subr.mxu0 0.0
      %597 = vmatpush1.msra.mxu0 %v558
      %598 = vmatprep.subr.mxu0 0.0
      %599 = vmatpush1.msra.mxu0 %v559
      %600 = vmatprep.subr.mxu0 0.0
      %601 = vmatpush1.msra.mxu0 %v560
      %602 = vmatprep.subr.mxu0 0.0
      %603 = vmatpush1.msra.mxu0 %v561
      %604 = vmatprep.subr.mxu0 0.0
      %605 = vmatpush1.msra.mxu0 %v562
      %606 = vmatprep.subr.mxu0 0.0
      %607 = vmatpush1.msra.mxu0 %v563
      %608 = vmatprep.subr.mxu0 0.0
      %609 = vmatpush1.msra.mxu0 0.0
      %610 = vmatprep.subr.mxu0 0.0
      %611 = vmatpush1.msra.mxu0 0.0
      %612 = vmatprep.subr.mxu0 0.0
      %613 = vmatpush1.msra.mxu0 0.0
      %614 = vmatprep.subr.mxu0 0.0
      %615 = vmatpush1.msra.mxu0 0.0
      %616 = vmatprep.subr.mxu0 0.0
      %617 = vmatpush1.msra.mxu0 0.0
      %618 = vmatprep.subr.mxu0 0.0
      %619 = vmatpush1.msra.mxu0 0.0
      %620 = vmatprep.subr.mxu0 0.0
      %621 = vmatpush1.msra.mxu0 0.0
      %622 = vmatprep.subr.mxu0 0.0
      %623 = vmatpush1.msra.mxu0 0.0
      %624 = vmatprep.subr.mxu0 0.0
      %625 = vmatpush1.msra.mxu0 0.0
      %626 = vmatprep.subr.mxu0 0.0
      %627 = vmatpush1.msra.mxu0 0.0
      %628 = vmatprep.subr.mxu0 0.0
      %629 = vmatpush1.msra.mxu0 0.0
      %630 = vmatprep.subr.mxu0 0.0
      %631 = vmatpush1.msra.mxu0 0.0
      %632 = vmatprep.subr.mxu0 0.0
      %633 = vmatpush1.msra.mxu0 0.0
      %634 = vmatprep.subr.mxu0 0.0
      %635 = vmatpush1.msra.mxu0 0.0
      %636 = vmatprep.subr.mxu0 0.0
      %637 = vmatpush1.msra.mxu0 0.0
      %638 = vmatprep.subr.mxu0 0.0
      %639 = vmatpush1.msra.mxu0 0.0
      %640 = vmatprep.subr.mxu0 0.0
      %641 = vmatpush1.msra.mxu0 0.0
      %642 = vmatprep.subr.mxu0 0.0
      %643 = vmatpush1.msra.mxu0 0.0
      %644 = vmatprep.subr.mxu0 0.0
      %645 = vmatpush1.msra.mxu0 0.0
      %646 = vmatprep.subr.mxu0 0.0
      %647 = vmatpush1.msra.mxu0 0.0
      %648 = vmatprep.subr.mxu0 0.0
      %649 = vmatpush1.msra.mxu0 0.0
      %650 = vmatprep.subr.mxu0 0.0
      %651 = vmatpush1.msra.mxu0 0.0
      %652 = vmatprep.subr.mxu0 0.0
      %653 = vmatpush1.msra.mxu0 0.0
      %654 = vmatprep.subr.mxu0 0.0
      %655 = vmatpush1.msra.mxu0 0.0
      %656 = vmatprep.subr.mxu0 0.0
      %657 = vmatpush1.msra.mxu0 0.0
      %658 = vmatprep.subr.mxu0 0.0
      %659 = vmatpush1.msra.mxu0 0.0
      %660 = vmatprep.mubr.f32.mxu0 0.0
      %661 = vmatmul.mubr.f32.gmra.mrb[0].mxu0 %v573
      %v662 = vpop.f32.mrb[0].mxu0
      %v663 = vadd.f32 %v569, %v662
      %v664 = vpop.f32.mrb[0].mxu0
      %665 = vmatprep.mubr.f32.mxu0 0.0
      %666 = vmatmul.mubr.f32.gmra.mrb[0].mxu0 %v576
      %v667 = vpop.f32.mrb[0].mxu0
      %v668 = vadd.f32 %v569, %v667
      %v669 = vpop.f32.mrb[0].mxu0
      %670 = vmatprep.mubr.f32.mxu0 0.0
      %671 = vmatmul.mubr.f32.gmra.mrb[0].mxu0 %v579
      %v672 = vpop.f32.mrb[0].mxu0
      %v673 = vadd.f32 %v569, %v672
      %v674 = vpop.f32.mrb[0].mxu0
      %675 = vmatprep.mubr.f32.mxu0 0.0
      %676 = vmatmul.mubr.f32.gmra.mrb[0].mxu0 %v582
      %v677 = vpop.f32.mrb[0].mxu0
      %v678 = vadd.f32 %v569, %v677
      %v679 = vpop.f32.mrb[0].mxu0
      %680 = vmatprep.mubr.f32.mxu0 0.0
      %681 = vmatmul.mubr.f32.gmra.mrb[0].mxu0 %v585
      %v682 = vpop.f32.mrb[0].mxu0
      %v683 = vadd.f32 %v569, %v682
      %v684 = vpop.f32.mrb[0].mxu0
      %685 = vmatprep.mubr.f32.mxu0 0.0
      %686 = vmatmul.mubr.f32.gmra.mrb[0].mxu0 %v588
      %v687 = vpop.f32.mrb[0].mxu0
      %v688 = vadd.f32 %v569, %v687
      %v689 = vpop.f32.mrb[0].mxu0
      %690 = vmatprep.mubr.f32.mxu0 0.0
      %691 = vmatmul.mubr.f32.gmra.mrb[0].mxu0 %v591
      %v692 = vpop.f32.mrb[0].mxu0
      %v693 = vadd.f32 %v569, %v692
      %v694 = vpop.f32.mrb[0].mxu0
      %695 = vmatprep.mubr.f32.mxu0 0.0
      %696 = vmatmul.mubr.f32.gmra.mrb[0].mxu0 %v594
      %v697 = vpop.f32.mrb[0].mxu0
      %v698 = vadd.f32 %v569, %v697
      %v699 = vpop.f32.mrb[0].mxu0
      %700 = vdwg.mxu0
      %v701 = vld [vmem:[%s5] sm:$0xff]
      %v702 = vld [vmem:[%s5 + $0x8] sm:$0xff]
      %v703 = vld [vmem:[%s5 + $0x10] sm:$0xff]
      %v704 = vld [vmem:[%s5 + $0x18] sm:$0xff]
      %v705 = vld [vmem:[%s5 + $0x20] sm:$0xff]
      %v706 = vld [vmem:[%s5 + $0x28] sm:$0xff]
      %v707 = vld [vmem:[%s6] sm:$0x1]
      %v709 = vlaneseq
      %v710 = vshrl.u32 %v709, 7
      %v711 = vsub.s32 0, %v710
      %v712 = vrot.slane %v707, %v711
      %714 = vmatprep.subr.mxu0 0.0
      %715 = vmatpush1.msra.mxu0 %v701
      %716 = vmatprep.subr.mxu0 0.0
      %717 = vmatpush1.msra.mxu0 %v702
      %718 = vmatprep.subr.mxu0 0.0
      %719 = vmatpush1.msra.mxu0 %v703
      %720 = vmatprep.subr.mxu0 0.0
      %721 = vmatpush1.msra.mxu0 %v704
      %722 = vmatprep.subr.mxu0 0.0
      %723 = vmatpush1.msra.mxu0 %v705
      %724 = vmatprep.subr.mxu0 0.0
      %725 = vmatpush1.msra.mxu0 %v706
      %726 = vmatprep.subr.mxu0 0.0
      %727 = vmatpush1.msra.mxu0 0.0
      %728 = vmatprep.subr.mxu0 0.0
      %729 = vmatpush1.msra.mxu0 0.0
      %730 = vmatprep.subr.mxu0 0.0
      %731 = vmatpush1.msra.mxu0 0.0
      %732 = vmatprep.subr.mxu0 0.0
      %733 = vmatpush1.msra.mxu0 0.0
      %734 = vmatprep.subr.mxu0 0.0
      %735 = vmatpush1.msra.mxu0 0.0
      %736 = vmatprep.subr.mxu0 0.0
      %737 = vmatpush1.msra.mxu0 0.0
      %738 = vmatprep.subr.mxu0 0.0
      %739 = vmatpush1.msra.mxu0 0.0
      %740 = vmatprep.subr.mxu0 0.0
      %741 = vmatpush1.msra.mxu0 0.0
      %742 = vmatprep.subr.mxu0 0.0
      %743 = vmatpush1.msra.mxu0 0.0
      %744 = vmatprep.subr.mxu0 0.0
      %745 = vmatpush1.msra.mxu0 0.0
      %746 = vmatprep.subr.mxu0 0.0
      %747 = vmatpush1.msra.mxu0 0.0
      %748 = vmatprep.subr.mxu0 0.0
      %749 = vmatpush1.msra.mxu0 0.0
      %750 = vmatprep.subr.mxu0 0.0
      %751 = vmatpush1.msra.mxu0 0.0
      %752 = vmatprep.subr.mxu0 0.0
      %753 = vmatpush1.msra.mxu0 0.0
      %754 = vmatprep.subr.mxu0 0.0
      %755 = vmatpush1.msra.mxu0 0.0
      %756 = vmatprep.subr.mxu0 0.0
      %757 = vmatpush1.msra.mxu0 0.0
      %758 = vmatprep.subr.mxu0 0.0
      %759 = vmatpush1.msra.mxu0 0.0
      %760 = vmatprep.subr.mxu0 0.0
      %761 = vmatpush1.msra.mxu0 0.0
      %762 = vmatprep.subr.mxu0 0.0
      %763 = vmatpush1.msra.mxu0 0.0
      %764 = vmatprep.subr.mxu0 0.0
      %765 = vmatpush1.msra.mxu0 0.0
      %766 = vmatprep.subr.mxu0 0.0
      %767 = vmatpush1.msra.mxu0 0.0
      %768 = vmatprep.subr.mxu0 0.0
      %769 = vmatpush1.msra.mxu0 0.0
      %770 = vmatprep.subr.mxu0 0.0
      %771 = vmatpush1.msra.mxu0 0.0
      %772 = vmatprep.subr.mxu0 0.0
      %773 = vmatpush1.msra.mxu0 0.0
      %774 = vmatprep.subr.mxu0 0.0
      %775 = vmatpush1.msra.mxu0 0.0
      %776 = vmatprep.subr.mxu0 0.0
      %777 = vmatpush1.msra.mxu0 0.0
      %778 = vmatprep.mubr.f32.mxu0 0.0
      %779 = vmatmul.mubr.f32.gmra.mrb[0].mxu0 %v573
      %v780 = vpop.f32.mrb[0].mxu0
      %v781 = vadd.f32 %v712, %v780
      %v782 = vpop.f32.mrb[0].mxu0
      %783 = vmatprep.mubr.f32.mxu0 0.0
      %784 = vmatmul.mubr.f32.gmra.mrb[0].mxu0 %v576
      %v785 = vpop.f32.mrb[0].mxu0
      %v786 = vadd.f32 %v712, %v785
      %v787 = vpop.f32.mrb[0].mxu0
      %788 = vmatprep.mubr.f32.mxu0 0.0
      %789 = vmatmul.mubr.f32.gmra.mrb[0].mxu0 %v579
      %v790 = vpop.f32.mrb[0].mxu0
      %v791 = vadd.f32 %v712, %v790
      %v792 = vpop.f32.mrb[0].mxu0
      %793 = vmatprep.mubr.f32.mxu0 0.0
      %794 = vmatmul.mubr.f32.gmra.mrb[0].mxu0 %v582
      %v795 = vpop.f32.mrb[0].mxu0
      %v796 = vadd.f32 %v712, %v795
      %v797 = vpop.f32.mrb[0].mxu0
      %798 = vmatprep.mubr.f32.mxu0 0.0
      %799 = vmatmul.mubr.f32.gmra.mrb[0].mxu0 %v585
      %v800 = vpop.f32.mrb[0].mxu0
      %v801 = vadd.f32 %v712, %v800
      %v802 = vpop.f32.mrb[0].mxu0
      %803 = vmatprep.mubr.f32.mxu0 0.0
      %804 = vmatmul.mubr.f32.gmra.mrb[0].mxu0 %v588
      %v805 = vpop.f32.mrb[0].mxu0
      %v806 = vadd.f32 %v712, %v805
      %v807 = vpop.f32.mrb[0].mxu0
      %808 = vmatprep.mubr.f32.mxu0 0.0
      %809 = vmatmul.mubr.f32.gmra.mrb[0].mxu0 %v591
      %v810 = vpop.f32.mrb[0].mxu0
      %v811 = vadd.f32 %v712, %v810
      %v812 = vpop.f32.mrb[0].mxu0
      %813 = vmatprep.mubr.f32.mxu0 0.0
      %814 = vmatmul.mubr.f32.gmra.mrb[0].mxu0 %v594
      %v815 = vpop.f32.mrb[0].mxu0
      %v816 = vadd.f32 %v712, %v815
      %v817 = vpop.f32.mrb[0].mxu0
      %818 = vdwg.mxu0
      %v819 = vld [vmem:[%s7] sm:$0xff]
      %v820 = vld [vmem:[%s8] sm:$0x1]
      %v822 = vlaneseq
      %v823 = vshrl.u32 %v822, 7
      %v824 = vsub.s32 0, %v823
      %v825 = vrot.slane %v820, %v824
      %vm827 = vcmask 64512
      %v829 = vsel %vm827, %v663, 0
      %v832 = vsel %vm827, %v668, 0
      %v835 = vsel %vm827, %v673, 0
      %v838 = vsel %vm827, %v678, 0
      %v841 = vsel %vm827, %v683, 0
      %v844 = vsel %vm827, %v688, 0
      %v847 = vsel %vm827, %v693, 0
      %v850 = vsel %vm827, %v698, 0
      %852 = vmatprep.subr.mxu0 0.0
      %853 = vmatpush1.msra.mxu0 %v819
      %854 = vmatprep.subr.mxu0 0.0
      %855 = vmatpush1.msra.mxu0 0.0
      %856 = vmatprep.subr.mxu0 0.0
      %857 = vmatpush1.msra.mxu0 0.0
      %858 = vmatprep.subr.mxu0 0.0
      %859 = vmatpush1.msra.mxu0 0.0
      %860 = vmatprep.subr.mxu0 0.0
      %861 = vmatpush1.msra.mxu0 0.0
      %862 = vmatprep.subr.mxu0 0.0
      %863 = vmatpush1.msra.mxu0 0.0
      %864 = vmatprep.subr.mxu0 0.0
      %865 = vmatpush1.msra.mxu0 0.0
      %866 = vmatprep.subr.mxu0 0.0
      %867 = vmatpush1.msra.mxu0 0.0
      %868 = vmatprep.subr.mxu0 0.0
      %869 = vmatpush1.msra.mxu0 0.0
      %870 = vmatprep.subr.mxu0 0.0
      %871 = vmatpush1.msra.mxu0 0.0
      %872 = vmatprep.subr.mxu0 0.0
      %873 = vmatpush1.msra.mxu0 0.0
      %874 = vmatprep.subr.mxu0 0.0
      %875 = vmatpush1.msra.mxu0 0.0
      %876 = vmatprep.subr.mxu0 0.0
      %877 = vmatpush1.msra.mxu0 0.0
      %878 = vmatprep.subr.mxu0 0.0
      %879 = vmatpush1.msra.mxu0 0.0
      %880 = vmatprep.subr.mxu0 0.0
      %881 = vmatpush1.msra.mxu0 0.0
      %882 = vmatprep.subr.mxu0 0.0
      %883 = vmatpush1.msra.mxu0 0.0
      %884 = vmatprep.subr.mxu0 0.0
      %885 = vmatpush1.msra.mxu0 0.0
      %886 = vmatprep.subr.mxu0 0.0
      %887 = vmatpush1.msra.mxu0 0.0
      %888 = vmatprep.subr.mxu0 0.0
      %889 = vmatpush1.msra.mxu0 0.0
      %890 = vmatprep.subr.mxu0 0.0
      %891 = vmatpush1.msra.mxu0 0.0
      %892 = vmatprep.subr.mxu0 0.0
      %893 = vmatpush1.msra.mxu0 0.0
      %894 = vmatprep.subr.mxu0 0.0
      %895 = vmatpush1.msra.mxu0 0.0
      %896 = vmatprep.subr.mxu0 0.0
      %897 = vmatpush1.msra.mxu0 0.0
      %898 = vmatprep.subr.mxu0 0.0
      %899 = vmatpush1.msra.mxu0 0.0
      %900 = vmatprep.subr.mxu0 0.0
      %901 = vmatpush1.msra.mxu0 0.0
      %902 = vmatprep.subr.mxu0 0.0
      %903 = vmatpush1.msra.mxu0 0.0
      %904 = vmatprep.subr.mxu0 0.0
      %905 = vmatpush1.msra.mxu0 0.0
      %906 = vmatprep.subr.mxu0 0.0
      %907 = vmatpush1.msra.mxu0 0.0
      %908 = vmatprep.subr.mxu0 0.0
      %909 = vmatpush1.msra.mxu0 0.0
      %910 = vmatprep.subr.mxu0 0.0
      %911 = vmatpush1.msra.mxu0 0.0
      %912 = vmatprep.subr.mxu0 0.0
      %913 = vmatpush1.msra.mxu0 0.0
      %914 = vmatprep.subr.mxu0 0.0
      %915 = vmatpush1.msra.mxu0 0.0
      %916 = vmatprep.mubr.f32.mxu0 0.0
      %917 = vmatmul.mubr.f32.gmra.mrb[0].mxu0 %v829
      %v918 = vpop.f32.mrb[0].mxu0
      %v919 = vadd.f32 %v825, %v918
      %v920 = vpop.f32.mrb[0].mxu0
      %921 = vmatprep.mubr.f32.mxu0 0.0
      %922 = vmatmul.mubr.f32.gmra.mrb[0].mxu0 %v832
      %v923 = vpop.f32.mrb[0].mxu0
      %v924 = vadd.f32 %v825, %v923
      %v925 = vpop.f32.mrb[0].mxu0
      %926 = vmatprep.mubr.f32.mxu0 0.0
      %927 = vmatmul.mubr.f32.gmra.mrb[0].mxu0 %v835
      %v928 = vpop.f32.mrb[0].mxu0
      %v929 = vadd.f32 %v825, %v928
      %v930 = vpop.f32.mrb[0].mxu0
      %931 = vmatprep.mubr.f32.mxu0 0.0
      %932 = vmatmul.mubr.f32.gmra.mrb[0].mxu0 %v838
      %v933 = vpop.f32.mrb[0].mxu0
      %v934 = vadd.f32 %v825, %v933
      %v935 = vpop.f32.mrb[0].mxu0
      %936 = vmatprep.mubr.f32.mxu0 0.0
      %937 = vmatmul.mubr.f32.gmra.mrb[0].mxu0 %v841
      %v938 = vpop.f32.mrb[0].mxu0
      %v939 = vadd.f32 %v825, %v938
      %v940 = vpop.f32.mrb[0].mxu0
      %941 = vmatprep.mubr.f32.mxu0 0.0
      %942 = vmatmul.mubr.f32.gmra.mrb[0].mxu0 %v844
      %v943 = vpop.f32.mrb[0].mxu0
      %v944 = vadd.f32 %v825, %v943
      %v945 = vpop.f32.mrb[0].mxu0
      %946 = vmatprep.mubr.f32.mxu0 0.0
      %947 = vmatmul.mubr.f32.gmra.mrb[0].mxu0 %v847
      %v948 = vpop.f32.mrb[0].mxu0
      %v949 = vadd.f32 %v825, %v948
      %v950 = vpop.f32.mrb[0].mxu0
      %951 = vmatprep.mubr.f32.mxu0 0.0
      %952 = vmatmul.mubr.f32.gmra.mrb[0].mxu0 %v850
      %v953 = vpop.f32.mrb[0].mxu0
      %v954 = vadd.f32 %v825, %v953
      %v955 = vpop.f32.mrb[0].mxu0
      %956 = vdwg.mxu0
      %vm957 = vcmp.gt.f32.partialorder %v919, 0.0
      %vm958 = vcmp.gt.f32.partialorder %v924, 0.0
      %vm959 = vcmp.gt.f32.partialorder %v929, 0.0
      %vm960 = vcmp.gt.f32.partialorder %v934, 0.0
      %vm961 = vcmp.gt.f32.partialorder %v939, 0.0
      %vm962 = vcmp.gt.f32.partialorder %v944, 0.0
      %vm963 = vcmp.gt.f32.partialorder %v949, 0.0
      %vm964 = vcmp.gt.f32.partialorder %v954, 0.0
      %v965 = vmul.f32 %v919, 0.01
      %v966 = vmul.f32 %v924, 0.01
      %v967 = vmul.f32 %v929, 0.01
      %v968 = vmul.f32 %v934, 0.01
      %v969 = vmul.f32 %v939, 0.01
      %v970 = vmul.f32 %v944, 0.01
      %v971 = vmul.f32 %v949, 0.01
      %v972 = vmul.f32 %v954, 0.01
      %v973 = vsel %vm957, %v919, %v965
      %v974 = vsel %vm958, %v924, %v966
      %v975 = vsel %vm959, %v929, %v967
      %v976 = vsel %vm960, %v934, %v968
      %v977 = vsel %vm961, %v939, %v969
      %v978 = vsel %vm962, %v944, %v970
      %v979 = vsel %vm963, %v949, %v971
      %v980 = vsel %vm964, %v954, %v972
      %v981 = vld [vmem:[%s9] sm:$0xff]
      %v982 = vld [vmem:[%s9 + $0x8] sm:$0xff]
      %v983 = vld [vmem:[%s10] sm:$0x1]
      %v985 = vlaneseq
      %v986 = vshrl.u32 %v985, 7
      %v987 = vsub.s32 0, %v986
      %v988 = vrot.slane %v983, %v987
      %v991 = vsel %vm404, %v973, 0
      %v994 = vsel %vm404, %v974, 0
      %v997 = vsel %vm404, %v975, 0
      %v1000 = vsel %vm404, %v976, 0
      %v1003 = vsel %vm404, %v977, 0
      %v1006 = vsel %vm404, %v978, 0
      %v1009 = vsel %vm404, %v979, 0
      %v1012 = vsel %vm404, %v980, 0
      %1014 = vmatprep.subr.mxu0 0.0
      %1015 = vmatpush1.msra.mxu0 %v981
      %1016 = vmatprep.subr.mxu0 0.0
      %1017 = vmatpush1.msra.mxu0 %v982
      %1018 = vmatprep.subr.mxu0 0.0
      %1019 = vmatpush1.msra.mxu0 0.0
      %1020 = vmatprep.subr.mxu0 0.0
      %1021 = vmatpush1.msra.mxu0 0.0
      %1022 = vmatprep.subr.mxu0 0.0
      %1023 = vmatpush1.msra.mxu0 0.0
      %1024 = vmatprep.subr.mxu0 0.0
      %1025 = vmatpush1.msra.mxu0 0.0
      %1026 = vmatprep.subr.mxu0 0.0
      %1027 = vmatpush1.msra.mxu0 0.0
      %1028 = vmatprep.subr.mxu0 0.0
      %1029 = vmatpush1.msra.mxu0 0.0
      %1030 = vmatprep.subr.mxu0 0.0
      %1031 = vmatpush1.msra.mxu0 0.0
      %1032 = vmatprep.subr.mxu0 0.0
      %1033 = vmatpush1.msra.mxu0 0.0
      %1034 = vmatprep.subr.mxu0 0.0
      %1035 = vmatpush1.msra.mxu0 0.0
      %1036 = vmatprep.subr.mxu0 0.0
      %1037 = vmatpush1.msra.mxu0 0.0
      %1038 = vmatprep.subr.mxu0 0.0
      %1039 = vmatpush1.msra.mxu0 0.0
      %1040 = vmatprep.subr.mxu0 0.0
      %1041 = vmatpush1.msra.mxu0 0.0
      %1042 = vmatprep.subr.mxu0 0.0
      %1043 = vmatpush1.msra.mxu0 0.0
      %1044 = vmatprep.subr.mxu0 0.0
      %1045 = vmatpush1.msra.mxu0 0.0
      %1046 = vmatprep.subr.mxu0 0.0
      %1047 = vmatpush1.msra.mxu0 0.0
      %1048 = vmatprep.subr.mxu0 0.0
      %1049 = vmatpush1.msra.mxu0 0.0
      %1050 = vmatprep.subr.mxu0 0.0
      %1051 = vmatpush1.msra.mxu0 0.0
      %1052 = vmatprep.subr.mxu0 0.0
      %1053 = vmatpush1.msra.mxu0 0.0
      %1054 = vmatprep.subr.mxu0 0.0
      %1055 = vmatpush1.msra.mxu0 0.0
      %1056 = vmatprep.subr.mxu0 0.0
      %1057 = vmatpush1.msra.mxu0 0.0
      %1058 = vmatprep.subr.mxu0 0.0
      %1059 = vmatpush1.msra.mxu0 0.0
      %1060 = vmatprep.subr.mxu0 0.0
      %1061 = vmatpush1.msra.mxu0 0.0
      %1062 = vmatprep.subr.mxu0 0.0
      %1063 = vmatpush1.msra.mxu0 0.0
      %1064 = vmatprep.subr.mxu0 0.0
      %1065 = vmatpush1.msra.mxu0 0.0
      %1066 = vmatprep.subr.mxu0 0.0
      %1067 = vmatpush1.msra.mxu0 0.0
      %1068 = vmatprep.subr.mxu0 0.0
      %1069 = vmatpush1.msra.mxu0 0.0
      %1070 = vmatprep.subr.mxu0 0.0
      %1071 = vmatpush1.msra.mxu0 0.0
      %1072 = vmatprep.subr.mxu0 0.0
      %1073 = vmatpush1.msra.mxu0 0.0
      %1074 = vmatprep.subr.mxu0 0.0
      %1075 = vmatpush1.msra.mxu0 0.0
      %1076 = vmatprep.subr.mxu0 0.0
      %1077 = vmatpush1.msra.mxu0 0.0
      %1078 = vmatprep.mubr.f32.mxu0 0.0
      %1079 = vmatmul.mubr.f32.gmra.mrb[0].mxu0 %v991
      %v1080 = vpop.f32.mrb[0].mxu0
      %v1081 = vadd.f32 %v988, %v1080
      %v1082 = vpop.f32.mrb[0].mxu0
      %1083 = vmatprep.mubr.f32.mxu0 0.0
      %1084 = vmatmul.mubr.f32.gmra.mrb[0].mxu0 %v994
      %v1085 = vpop.f32.mrb[0].mxu0
      %v1086 = vadd.f32 %v988, %v1085
      %v1087 = vpop.f32.mrb[0].mxu0
      %1088 = vmatprep.mubr.f32.mxu0 0.0
      %1089 = vmatmul.mubr.f32.gmra.mrb[0].mxu0 %v997
      %v1090 = vpop.f32.mrb[0].mxu0
      %v1091 = vadd.f32 %v988, %v1090
      %v1092 = vpop.f32.mrb[0].mxu0
      %1093 = vmatprep.mubr.f32.mxu0 0.0
      %1094 = vmatmul.mubr.f32.gmra.mrb[0].mxu0 %v1000
      %v1095 = vpop.f32.mrb[0].mxu0
      %v1096 = vadd.f32 %v988, %v1095
      %v1097 = vpop.f32.mrb[0].mxu0
      %1098 = vmatprep.mubr.f32.mxu0 0.0
      %1099 = vmatmul.mubr.f32.gmra.mrb[0].mxu0 %v1003
      %v1100 = vpop.f32.mrb[0].mxu0
      %v1101 = vadd.f32 %v988, %v1100
      %v1102 = vpop.f32.mrb[0].mxu0
      %1103 = vmatprep.mubr.f32.mxu0 0.0
      %1104 = vmatmul.mubr.f32.gmra.mrb[0].mxu0 %v1006
      %v1105 = vpop.f32.mrb[0].mxu0
      %v1106 = vadd.f32 %v988, %v1105
      %v1107 = vpop.f32.mrb[0].mxu0
      %1108 = vmatprep.mubr.f32.mxu0 0.0
      %1109 = vmatmul.mubr.f32.gmra.mrb[0].mxu0 %v1009
      %v1110 = vpop.f32.mrb[0].mxu0
      %v1111 = vadd.f32 %v988, %v1110
      %v1112 = vpop.f32.mrb[0].mxu0
      %1113 = vmatprep.mubr.f32.mxu0 0.0
      %1114 = vmatmul.mubr.f32.gmra.mrb[0].mxu0 %v1012
      %v1115 = vpop.f32.mrb[0].mxu0
      %v1116 = vadd.f32 %v988, %v1115
      %v1117 = vpop.f32.mrb[0].mxu0
      %1118 = vdwg.mxu0
      %v1119 = vsel %vm827, %v1081, -inf
      %1120 = vmax.xlane.f32.xlu0 %v1119
      %v1121 = vpop.xlane.xlu0 %1120
      %v1122 = vsel %vm827, %v1086, -inf
      %1123 = vmax.xlane.f32.xlu0 %v1122
      %v1124 = vpop.xlane.xlu0 %1123
      %v1125 = vsel %vm827, %v1091, -inf
      %1126 = vmax.xlane.f32.xlu0 %v1125
      %v1127 = vpop.xlane.xlu0 %1126
      %v1128 = vsel %vm827, %v1096, -inf
      %1129 = vmax.xlane.f32.xlu0 %v1128
      %v1130 = vpop.xlane.xlu0 %1129
      %v1131 = vsel %vm827, %v1101, -inf
      %1132 = vmax.xlane.f32.xlu0 %v1131
      %v1133 = vpop.xlane.xlu0 %1132
      %v1134 = vsel %vm827, %v1106, -inf
      %1135 = vmax.xlane.f32.xlu0 %v1134
      %v1136 = vpop.xlane.xlu0 %1135
      %v1137 = vsel %vm827, %v1111, -inf
      %1138 = vmax.xlane.f32.xlu0 %v1137
      %v1139 = vpop.xlane.xlu0 %1138
      %v1140 = vsel %vm827, %v1116, -inf
      %1141 = vmax.xlane.f32.xlu0 %v1140
      %v1142 = vpop.xlane.xlu0 %1141
      %v1143 = vsub.f32 %v1081, %v1121
      %v1144 = vsub.f32 %v1086, %v1124
      %v1145 = vsub.f32 %v1091, %v1127
      %v1146 = vsub.f32 %v1096, %v1130
      %v1147 = vsub.f32 %v1101, %v1133
      %v1148 = vsub.f32 %v1106, %v1136
      %v1149 = vsub.f32 %v1111, %v1139
      %v1150 = vsub.f32 %v1116, %v1142
      %v1151 = vmul.f32 %v1143, 1.442695
      %v1152 = vpow.pop %v1151
      %v1153 = vmul.f32 %v1144, 1.442695
      %v1154 = vpow.pop %v1153
      %v1155 = vmul.f32 %v1145, 1.442695
      %v1156 = vpow.pop %v1155
      %v1157 = vmul.f32 %v1146, 1.442695
      %v1158 = vpow.pop %v1157
      %v1159 = vmul.f32 %v1147, 1.442695
      %v1160 = vpow.pop %v1159
      %v1161 = vmul.f32 %v1148, 1.442695
      %v1162 = vpow.pop %v1161
      %v1163 = vmul.f32 %v1149, 1.442695
      %v1164 = vpow.pop %v1163
      %v1165 = vmul.f32 %v1150, 1.442695
      %v1166 = vpow.pop %v1165
      %v1167 = vsel %vm827, %v1152, 0.0
      %1168 = vadd.xlane.f32.xlu0 %v1167
      %v1169 = vpop.xlane.xlu0 %1168
      %v1170 = vsel %vm827, %v1154, 0.0
      %1171 = vadd.xlane.f32.xlu0 %v1170
      %v1172 = vpop.xlane.xlu0 %1171
      %v1173 = vsel %vm827, %v1156, 0.0
      %1174 = vadd.xlane.f32.xlu0 %v1173
      %v1175 = vpop.xlane.xlu0 %1174
      %v1176 = vsel %vm827, %v1158, 0.0
      %1177 = vadd.xlane.f32.xlu0 %v1176
      %v1178 = vpop.xlane.xlu0 %1177
      %v1179 = vsel %vm827, %v1160, 0.0
      %1180 = vadd.xlane.f32.xlu0 %v1179
      %v1181 = vpop.xlane.xlu0 %1180
      %v1182 = vsel %vm827, %v1162, 0.0
      %1183 = vadd.xlane.f32.xlu0 %v1182
      %v1184 = vpop.xlane.xlu0 %1183
      %v1185 = vsel %vm827, %v1164, 0.0
      %1186 = vadd.xlane.f32.xlu0 %v1185
      %v1187 = vpop.xlane.xlu0 %1186
      %v1188 = vsel %vm827, %v1166, 0.0
      %1189 = vadd.xlane.f32.xlu0 %v1188
      %v1190 = vpop.xlane.xlu0 %1189
      %v1191 = vrcp.pop %v1169
      %v1192 = vmul.f32 %v1152, %v1191
      %v1193 = vrcp.pop %v1172
      %v1194 = vmul.f32 %v1154, %v1193
      %v1195 = vrcp.pop %v1175
      %v1196 = vmul.f32 %v1156, %v1195
      %v1197 = vrcp.pop %v1178
      %v1198 = vmul.f32 %v1158, %v1197
      %v1199 = vrcp.pop %v1181
      %v1200 = vmul.f32 %v1160, %v1199
      %v1201 = vrcp.pop %v1184
      %v1202 = vmul.f32 %v1162, %v1201
      %v1203 = vrcp.pop %v1187
      %v1204 = vmul.f32 %v1164, %v1203
      %v1205 = vrcp.pop %v1190
      %v1206 = vmul.f32 %v1166, %v1205
      %v1207 = vmul.f32 %v1192, %v781
      %v1208 = vmul.f32 %v1194, %v786
      %v1209 = vmul.f32 %v1196, %v791
      %v1210 = vmul.f32 %v1198, %v796
      %v1211 = vmul.f32 %v1200, %v801
      %v1212 = vmul.f32 %v1202, %v806
      %v1213 = vmul.f32 %v1204, %v811
      %v1214 = vmul.f32 %v1206, %v816
      %v1215 = vsel %vm827, %v1207, 0.0
      %v1216 = vsel %vm827, %v1209, 0.0
      %v1217 = vadd.f32 %v1215, %v1216
      %v1218 = vsel %vm827, %v1211, 0.0
      %v1219 = vadd.f32 %v1217, %v1218
      %v1220 = vsel %vm827, %v1213, 0.0
      %v1221 = vadd.f32 %v1219, %v1220
      %v1222 = vsel %vm827, %v1208, 0.0
      %v1223 = vsel %vm827, %v1210, 0.0
      %v1224 = vadd.f32 %v1222, %v1223
      %v1225 = vsel %vm827, %v1212, 0.0
      %v1226 = vadd.f32 %v1224, %v1225
      %v1227 = vsel %vm827, %v1214, 0.0
      %v1228 = vadd.f32 %v1226, %v1227
      %1229 = vst.msk [vmem:[%s386] sm:$0xff] %vm827, %v1221
      %1230 = vst.msk [vmem:[%s386 + $0x8] sm:$0xff] %vm827, %v1228
      %p1231 = scmp.lt.s32.totalorder %s22, 1
      %s1232 = scalar_select %p1231, %s22, 1
      %s1233 = smul.addr %s1232, 2
      %s1234 = smul.addr %s1233, 8
      %s1235 = scalar_lea.vmem %s11, %s1234
      // Predicated region
      $region65: #{attention_in_pnts.1} parent=63 // pred_check
        %p1236 = pneg %p276
      $region66: #{attention_in_pnts.1} parent=63 // pred_check_branch
        %1238 = sbr.rel (%p1236) target = $region68
      $region67: #{attention_in_pnts.1} parent=63 // pred_region
        _
      $region68: #{attention_in_pnts.1} parent=63 // pred_fallthru
        _
    $region64: #{attention_in_pnts.1} parent=5 // pred_fallthru
      _
    %p1239 = scmp.le.s32.totalorder 2, %s17
    // Predicated region
    $region69: #{attention_in_pnts.1} parent=5 // pred_check
      %p1240 = pneg %p1239
    $region70: #{attention_in_pnts.1} parent=5 // pred_check_branch
      %1242 = sbr.rel (%p1240) target = $region72
    $region71: #{attention_in_pnts.1} parent=5 // pred_region
      %s1243 = ssub.s32 %s17, 2
      // Predicated region
      $region73: #{attention_in_pnts.1} parent=71 // pred_check
        %p1244 = pneg %p282
      $region74: #{attention_in_pnts.1} parent=71 // pred_check_branch
        %1246 = sbr.rel (%p1244) target = $region76
      $region75: #{attention_in_pnts.1} parent=71 // pred_region
        %p1247 = scmp.lt.s32.totalorder %s23, 1
        %s1248 = scalar_select %p1247, %s23, 1
        %s1249 = smul.addr %s1248, 2
        %s1250 = smul.addr %s1249, 8
        %s1251 = scalar_lea.vmem %s11, %s1250
      $region76: #{attention_in_pnts.1} parent=71 // pred_fallthru
        _
    $region72: #{attention_in_pnts.1} parent=5 // pred_fallthru
      _
  $region6: #{attention_in_pnts.1} parent=0 // loop_footer
    %s21 = sadd.s32 1, %s17
  $region7: #{attention_in_pnts.1} parent=0 // loop_footer_branch
    %16 = sbr.rel target = $region3
  $region8: #{attention_in_pnts.1} parent=0 // loop_exit
    _

</llo_original>
